<compile_context>
chip_gen: v7x
topology: tpu7x:2x2x1
jax: 0.10.0
libtpu: 0.0.40
codegen_flags: <defaults>
</compile_context>

<pallas_src>
import functools

import jax
import jax.numpy as jnp
from jax.experimental import pallas as pl
from jax.experimental.pallas import tpu as pltpu

_LANES = 128
_MAX_BLOCK_ROWS = 4096          # (4096, 128) f32 = 2 MiB per input block


def _cdiv(a, b):
    return -(-a // b)


def _round_up(a, b):
    return _cdiv(a, b) * b


def _wrmse_kernel(c1_ref, y_ref, yp_ref, m_out_ref, s_out_ref, m_sc,
                  *, tiles_per_core, rows_valid):
    """One grid step of the single-pass, online-rescaled weighted SSE.

    c1_ref  : SMEM (1,)  f32      c1 = -y_std / Eref
    y_ref   : VMEM (tm, 128)      tile of y
    yp_ref  : VMEM (tm, 128)      tile of y_pred
    m_out   : VMEM (1, 1, 128)    per-core running max of neg (broadcast scalar)
    s_out   : VMEM (1, 1, 128)    per-core lane-partial sums of exp(neg-m)*(y-yp)^2
                                  (resident output block used as the accumulator)
    m_sc    : SMEM (1, 1) f32     running max of neg for this core
    """
    g = pl.program_id(0)
    t = pl.program_id(1)
    last_t = pl.num_programs(1) - 1
    tm = y_ref.shape[0]

    # Per-core init (t is the innermost, sequential axis).
    @pl.when(t == 0)
    def _():
        m_sc[0, 0] = jnp.float32(-jnp.inf)
        s_out_ref[...] = jnp.zeros_like(s_out_ref)

    c1 = c1_ref[0]                                    # -y_std / Eref

    # Ragged-tail masking (replaces wrapper-side padding): rows at or beyond
    # `rows_valid` contain garbage from the clipped out-of-bounds DMA.
    base_row = (g * tiles_per_core + t) * tm
    row_in_tile = jax.lax.broadcasted_iota(jnp.int32, y_ref.shape, 0)
    valid = row_in_tile < (rows_valid - base_row)

    y = y_ref[...]
    d = y - yp_ref[...]                               # (yd - yd_pred) / y_std
    # neg == -yd/Eref up to a constant; the y_mean term cancels under w/w.max().
    neg = jnp.where(valid, y * c1, -jnp.inf)

    m_old = m_sc[0, 0]
    m_new = jnp.maximum(m_old, jnp.max(neg))
    m_sc[0, 0] = m_new

    # Rescale the running sum only when the max actually moved
    # (exp(-inf) = 0 correctly zeroes the freshly-initialized first tile).
    @pl.when(m_new > m_old)
    def _():
        alpha = jnp.exp(jnp.full(s_out_ref.shape, m_old - m_new, jnp.float32))
        s_out_ref[...] = s_out_ref[...] * alpha

    # Masked contribution; jnp.where (select) keeps OOB garbage / NaNs out.
    contrib = jnp.where(valid, jnp.exp(neg - m_new) * (d * d), 0.0)
    tile_sum = jnp.sum(contrib, axis=0, keepdims=True)       # (1, 128) lane partials
    s_out_ref[...] = s_out_ref[...] + tile_sum.reshape(s_out_ref.shape)

    # Per-core finalize: emit this core's max (sum partials are already in s_out).
    @pl.when(t == last_t)
    def _():
        m_out_ref[...] = jnp.full(m_out_ref.shape, m_sc[0, 0], jnp.float32)


def wrmse_boltzmann_loss(y, y_pred, y_mean, y_std, eref,
                         max_block_rows=_MAX_BLOCK_ROWS):
    """Weighted-RMSE Boltzmann loss. y, y_pred: float arrays of identical shape."""
    y = jnp.asarray(y, jnp.float32).reshape(-1)
    y_pred = jnp.asarray(y_pred, jnp.float32).reshape(-1)
    n = y.shape[0]
    if n == 0:
        return jnp.float32(jnp.nan)        # mean over empty tensor -> nan (as torch)

    y_std = jnp.asarray(y_std, jnp.float32).reshape(())
    eref = jnp.asarray(eref, jnp.float32).reshape(())
    del y_mean                             # cancels under w / w.max()

    # Lane alignment.  Only when n % 128 != 0 do we pad (to the next 128) with an
    # existing value (diff = 0 and cannot raise the running max).
    rem = n % _LANES
    if rem:
        # TODO(synk): the lane-unaligned path still pays one wrapper-side pad copy;
        # a fully copy-free version needs 1-D blocks + element-level in-kernel masks.
        pad = _LANES - rem
        fill = jnp.broadcast_to(y[:1], (pad,))
        y = jnp.concatenate([y, fill])
        y_pred = jnp.concatenate([y_pred, fill])

    rows = y.shape[0] // _LANES            # == ceil(n / 128); all these rows are valid
    y2 = y.reshape(rows, _LANES)
    yp2 = y_pred.reshape(rows, _LANES)

    # ---- tiling -------------------------------------------------------------
    num_tiles = max(1, _cdiv(rows, max_block_rows))
    ncores = 1 if num_tiles == 1 else 2            # 2-way split for megacore parts
    num_tiles = _round_up(num_tiles, ncores)
    if num_tiles == 1:
        tm = rows                                  # whole array is one block
    else:
        tm = _round_up(_cdiv(rows, num_tiles), 8)  # (8,128)-aligned block rows
    tiles_per_core = num_tiles // ncores

    # ---- constants folded at trace time ------------------------------------
    c1 = (-y_std / eref).astype(jnp.float32).reshape(1)

    idx_map = lambda g, t: (g * tiles_per_core + t, 0)

    def _make_data_spec():
        # 3-deep buffering hides DMA-issue jitter on this near-zero-compute kernel;
        # fall back gracefully on jax versions without pipeline_mode.
        if tiles_per_core >= 3:
            try:
                return pl.BlockSpec((tm, _LANES), idx_map,
                                    pipeline_mode=pl.Buffered(3))
            except (TypeError, AttributeError):
                pass
        return pl.BlockSpec((tm, _LANES), idx_map)

    data_spec = _make_data_spec()
    part_spec = pl.BlockSpec((1, 1, _LANES), lambda g, t: (g, 0, 0))

    kernel = functools.partial(_wrmse_kernel,
                               tiles_per_core=tiles_per_core,
                               rows_valid=rows)

    m_part, s_part = pl.pallas_call(
        kernel,
        out_shape=(
            jax.ShapeDtypeStruct((ncores, 1, _LANES), jnp.float32),
            jax.ShapeDtypeStruct((ncores, 1, _LANES), jnp.float32),
        ),
        grid_spec=pltpu.PrefetchScalarGridSpec(
            num_scalar_prefetch=0,
            grid=(ncores, tiles_per_core),
            in_specs=[
                pl.BlockSpec(memory_space=pltpu.MemorySpace.SMEM),   # c1
                data_spec,                                           # y tile
                data_spec,                                           # y_pred tile
            ],
            out_specs=(part_spec, part_spec),
            scratch_shapes=[pltpu.SMEM((1, 1), jnp.float32)],        # running max
        ),
        compiler_params=pltpu.CompilerParams(
            dimension_semantics=("parallel", "arbitrary")),
        cost_estimate=pl.CostEstimate(flops=8 * n, transcendentals=n,
                                      bytes_accessed=8 * n),
    )(c1, y2, yp2)

    # ---- combine per-core partials + final sqrt (tiny, done in JAX) ---------
    m_g = m_part[:, 0, 0]                               # (ncores,)
    s_g = jnp.sum(s_part[:, 0, :], axis=-1)             # (ncores,)
    m_glob = jnp.max(m_g)
    total = jnp.sum(s_g * jnp.exp(m_g - m_glob))
    # total = sum_i exp(neg_i - max_neg) * (y_i - y_pred_i)^2
    return jnp.sqrt(total * (y_std * y_std) / n)


def _reference(y, y_pred, y_mean, y_std, eref):
    yd = y * y_std + y_mean
    yd_pred = y_pred * y_std + y_mean
    w = jnp.exp(-yd / eref)
    w = w / jnp.max(w)
    return jnp.sqrt(jnp.mean(w * (yd - yd_pred) ** 2))


if __name__ == "__main__":
    key = jax.random.PRNGKey(0)

    # Deterministic "parameters" of the loss module (set_scale + Eref).
    y_mean, y_std, eref = 2.0, 0.5, 1.0

    # (N, max_block_rows): single-tile aligned / multi-tile 2-core ragged / unaligned N.
    checks = [
        (4096, _MAX_BLOCK_ROWS),
        (4224, 8),
        (1000, _MAX_BLOCK_ROWS),
    ]

    for n_elems, mbr in checks:
        key, k1, k2 = jax.random.split(key, 3)
        y = jax.random.normal(k1, (n_elems,), dtype=jnp.float32)
        y_pred = y + 0.1 * jax.random.normal(k2, (n_elems,), dtype=jnp.float32)

        loss = wrmse_boltzmann_loss(y, y_pred, y_mean, y_std, eref,
                                    max_block_rows=mbr)
        loss = jax.block_until_ready(loss)

        ref = _reference(y, y_pred, y_mean, y_std, eref)
        assert jnp.allclose(loss, ref, rtol=1e-3, atol=1e-5), (n_elems, loss, ref)

    print("KERNEL_OK")
</pallas_src>

<mosaic_0001>
module attributes {stable_mosaic.version = 11 : i64} {
  func.func @_wrmse_kernel(%arg0: i32, %arg1: i32, %arg2: memref<1xf32, #tpu.memory_space<smem>>, %arg3: memref<32x128xf32, #tpu.memory_space<vmem>>, %arg4: memref<32x128xf32, #tpu.memory_space<vmem>>, %arg5: memref<1x1x128xf32, #tpu.memory_space<vmem>>, %arg6: memref<1x1x128xf32, #tpu.memory_space<vmem>>, %arg7: memref<1x1xf32, #tpu.memory_space<smem>>) attributes {dimension_semantics = [#tpu.dimension_semantics<parallel>, #tpu.dimension_semantics<arbitrary>], iteration_bounds = array<i64: 1, 1>, scalar_prefetch = 0 : i64, scratch_operands = 1 : i64, tpu.core_type = #tpu.core_type<tc>, window_params = [{transform_indices = @transform_0, window_bounds = array<i64: 1>}, {transform_indices = @transform_1, window_bounds = array<i64: 32, 128>}, {transform_indices = @transform_2, window_bounds = array<i64: 32, 128>}, {transform_indices = @transform_3, window_bounds = array<i64: 1, 1, 128>}, {transform_indices = @transform_4, window_bounds = array<i64: 1, 1, 128>}]} {
    %c0_i32 = arith.constant 0 : i32
    %0 = arith.cmpi eq, %arg1, %c0_i32 : i32
    %1 = arith.extui %0 : i1 to i32
    %c0_i32_0 = arith.constant 0 : i32
    %2 = arith.cmpi ne, %1, %c0_i32_0 : i32
    scf.if %2 {
      %cst_22 = arith.constant 0xFF800000 : f32
      %c0_23 = arith.constant 0 : index
      %c0_24 = arith.constant 0 : index
      %44 = memref.load %arg7[%c0_23, %c0_24] : memref<1x1xf32, #tpu.memory_space<smem>>
      memref.store %cst_22, %arg7[%c0_23, %c0_24] : memref<1x1xf32, #tpu.memory_space<smem>>
      %cst_25 = arith.constant 0.000000e+00 : f32
      %45 = vector.broadcast %cst_25 : f32 to vector<1x1x128xf32>
      %c0_26 = arith.constant 0 : index
      %c0_27 = arith.constant 0 : index
      %c0_28 = arith.constant 0 : index
      %46 = vector.load %arg6[%c0_26, %c0_27, %c0_28] : memref<1x1x128xf32, #tpu.memory_space<vmem>>, vector<1x1x128xf32>
      tpu.vector_store %arg6[%c0_26, %c0_27, %c0_28], %45 {strides = array<i32>} : memref<1x1x128xf32, #tpu.memory_space<vmem>>, vector<1x1x128xf32>,
    } else {
    }
    %c0 = arith.constant 0 : index
    %3 = memref.load %arg2[%c0] : memref<1xf32, #tpu.memory_space<smem>>
    %c1_i32 = arith.constant 1 : i32
    %4 = arith.muli %arg0, %c1_i32 : i32
    %5 = arith.addi %4, %arg1 : i32
    %c32_i32 = arith.constant 32 : i32
    %6 = arith.muli %5, %c32_i32 : i32
    %7 = tpu.iota {dimensions = array<i32: 0>} : vector<32x128xi32>
    %c32_i32_1 = arith.constant 32 : i32
    %8 = arith.subi %c32_i32_1, %6 : i32
    %9 = vector.broadcast %8 : i32 to vector<32x128xi32>
    %10 = arith.cmpi slt, %7, %9 : vector<32x128xi32>
    %c0_2 = arith.constant 0 : index
    %c0_3 = arith.constant 0 : index
    %11 = vector.load %arg3[%c0_2, %c0_3] : memref<32x128xf32, #tpu.memory_space<vmem>>, vector<32x128xf32>
    %c0_4 = arith.constant 0 : index
    %c0_5 = arith.constant 0 : index
    %12 = vector.load %arg4[%c0_4, %c0_5] : memref<32x128xf32, #tpu.memory_space<vmem>>, vector<32x128xf32>
    %13 = arith.subf %11, %12 : vector<32x128xf32>
    %14 = vector.broadcast %3 : f32 to vector<32x128xf32>
    %15 = arith.mulf %11, %14 : vector<32x128xf32>
    %cst = arith.constant 0xFF800000 : f32
    %16 = vector.broadcast %cst : f32 to vector<32x128xf32>
    %17 = arith.select %10, %15, %16 : vector<32x128xi1>, vector<32x128xf32>
    %c0_6 = arith.constant 0 : index
    %c0_7 = arith.constant 0 : index
    %18 = memref.load %arg7[%c0_6, %c0_7] : memref<1x1xf32, #tpu.memory_space<smem>>
    %19 = vector.shape_cast %17 : vector<32x128xf32> to vector<1x32x128xf32>
    %cst_8 = arith.constant dense<0xFF800000> : vector<1xf32>
    %20 = vector.multi_reduction <maximumf>, %19, %cst_8 [1, 2] : vector<1x32x128xf32> to vector<1xf32>
    %21 = vector.shape_cast %20 : vector<1xf32> to vector<1x1x1xf32>
    %22 = vector.extract %21[0, 0, 0] : f32 from vector<1x1x1xf32>
    %23 = arith.maximumf %18, %22 : f32
    %c0_9 = arith.constant 0 : index
    %c0_10 = arith.constant 0 : index
    %24 = memref.load %arg7[%c0_9, %c0_10] : memref<1x1xf32, #tpu.memory_space<smem>>
    memref.store %23, %arg7[%c0_9, %c0_10] : memref<1x1xf32, #tpu.memory_space<smem>>
    %25 = arith.cmpf ogt, %23, %18 : f32
    %26 = arith.extui %25 : i1 to i32
    %c0_i32_11 = arith.constant 0 : i32
    %27 = arith.cmpi ne, %26, %c0_i32_11 : i32
    scf.if %27 {
      %44 = arith.subf %18, %23 : f32
      %45 = vector.broadcast %44 : f32 to vector<1x1x128xf32>
      %46 = math.exp %45 : vector<1x1x128xf32>
      %c0_22 = arith.constant 0 : index
      %c0_23 = arith.constant 0 : index
      %c0_24 = arith.constant 0 : index
      %47 = vector.load %arg6[%c0_22, %c0_23, %c0_24] : memref<1x1x128xf32, #tpu.memory_space<vmem>>, vector<1x1x128xf32>
      %48 = arith.mulf %47, %46 : vector<1x1x128xf32>
      %c0_25 = arith.constant 0 : index
      %c0_26 = arith.constant 0 : index
      %c0_27 = arith.constant 0 : index
      %49 = vector.load %arg6[%c0_25, %c0_26, %c0_27] : memref<1x1x128xf32, #tpu.memory_space<vmem>>, vector<1x1x128xf32>
      tpu.vector_store %arg6[%c0_25, %c0_26, %c0_27], %48 {strides = array<i32>} : memref<1x1x128xf32, #tpu.memory_space<vmem>>, vector<1x1x128xf32>,
    } else {
    }
    %28 = vector.broadcast %23 : f32 to vector<32x128xf32>
    %29 = arith.subf %17, %28 : vector<32x128xf32>
    %30 = math.exp %29 : vector<32x128xf32>
    %31 = arith.mulf %13, %13 : vector<32x128xf32>
    %32 = arith.mulf %30, %31 : vector<32x128xf32>
    %cst_12 = arith.constant 0.000000e+00 : f32
    %33 = vector.broadcast %cst_12 : f32 to vector<32x128xf32>
    %34 = arith.select %10, %32, %33 : vector<32x128xi1>, vector<32x128xf32>
    %cst_13 = arith.constant dense<0.000000e+00> : vector<128xf32>
    %35 = vector.multi_reduction <add>, %34, %cst_13 [0] : vector<32x128xf32> to vector<128xf32>
    %36 = vector.shape_cast %35 : vector<128xf32> to vector<1x128xf32>
    %c0_14 = arith.constant 0 : index
    %c0_15 = arith.constant 0 : index
    %c0_16 = arith.constant 0 : index
    %37 = vector.load %arg6[%c0_14, %c0_15, %c0_16] : memref<1x1x128xf32, #tpu.memory_space<vmem>>, vector<1x1x128xf32>
    %38 = vector.shape_cast %36 : vector<1x128xf32> to vector<1x1x128xf32>
    %39 = arith.addf %37, %38 : vector<1x1x128xf32>
    %c0_17 = arith.constant 0 : index
    %c0_18 = arith.constant 0 : index
    %c0_19 = arith.constant 0 : index
    %40 = vector.load %arg6[%c0_17, %c0_18, %c0_19] : memref<1x1x128xf32, #tpu.memory_space<vmem>>, vector<1x1x128xf32>
    tpu.vector_store %arg6[%c0_17, %c0_18, %c0_19], %39 {strides = array<i32>} : memref<1x1x128xf32, #tpu.memory_space<vmem>>, vector<1x1x128xf32>,
    %c0_i32_20 = arith.constant 0 : i32
    %41 = arith.cmpi eq, %arg1, %c0_i32_20 : i32
    %42 = arith.extui %41 : i1 to i32
    %c0_i32_21 = arith.constant 0 : i32
    %43 = arith.cmpi ne, %42, %c0_i32_21 : i32
    scf.if %43 {
      %c0_22 = arith.constant 0 : index
      %c0_23 = arith.constant 0 : index
      %44 = memref.load %arg7[%c0_22, %c0_23] : memref<1x1xf32, #tpu.memory_space<smem>>
      %45 = vector.broadcast %44 : f32 to vector<1x1x128xf32>
      %c0_24 = arith.constant 0 : index
      %c0_25 = arith.constant 0 : index
      %c0_26 = arith.constant 0 : index
      %46 = vector.load %arg5[%c0_24, %c0_25, %c0_26] : memref<1x1x128xf32, #tpu.memory_space<vmem>>, vector<1x1x128xf32>
      tpu.vector_store %arg5[%c0_24, %c0_25, %c0_26], %45 {strides = array<i32>} : memref<1x1x128xf32, #tpu.memory_space<vmem>>, vector<1x1x128xf32>,
    } else {
    }
    return
  }
  func.func @transform_0(%arg0: i32, %arg1: i32) -> i32 {
    %c0_i32 = arith.constant 0 : i32
    %c0_i32_0 = arith.constant 0 : i32
    return %c0_i32 : i32
  }
  func.func @transform_1(%arg0: i32, %arg1: i32) -> (i32, i32) {
    %c1_i32 = arith.constant 1 : i32
    %0 = arith.muli %arg0, %c1_i32 : i32
    %1 = arith.addi %0, %arg1 : i32
    %c0_i32 = arith.constant 0 : i32
    %c0_i32_0 = arith.constant 0 : i32
    return %1, %c0_i32 : i32, i32
  }
  func.func @transform_2(%arg0: i32, %arg1: i32) -> (i32, i32) {
    %c1_i32 = arith.constant 1 : i32
    %0 = arith.muli %arg0, %c1_i32 : i32
    %1 = arith.addi %0, %arg1 : i32
    %c0_i32 = arith.constant 0 : i32
    %c0_i32_0 = arith.constant 0 : i32
    return %1, %c0_i32 : i32, i32
  }
  func.func @transform_3(%arg0: i32, %arg1: i32) -> (i32, i32, i32) {
    %c0_i32 = arith.constant 0 : i32
    %c0_i32_0 = arith.constant 0 : i32
    %c0_i32_1 = arith.constant 0 : i32
    return %arg0, %c0_i32, %c0_i32_0 : i32, i32, i32
  }
  func.func @transform_4(%arg0: i32, %arg1: i32) -> (i32, i32, i32) {
    %c0_i32 = arith.constant 0 : i32
    %c0_i32_0 = arith.constant 0 : i32
    %c0_i32_1 = arith.constant 0 : i32
    return %arg0, %c0_i32, %c0_i32_0 : i32, i32, i32
  }
}

</mosaic_0001>

<llo_original>
// kernel: tpu_custom_call.1
$region0: #{tpu_custom_call.1}
  #allocation0 [shape = 'u32[]', space=smem, size = 0x4, offset = 0x4, fixed_abs, tag = 'smem constant byte address 0x4 - core index']
  #allocation1 [shape = 'u32[144,128]{1,0:T(1,128)}', space=vmem, size = 0x12000, scoped, tag = 'internal scratch']
  #allocation2 [shape = 'f32[1,1]{1,0:T(1,128)}', space=smem, size = 0x200, scoped, tag = 'scratch operand']
  #allocation3 [shape = 'f32[1]{0:T(128)S(6)}', space=smem, size = 0x200, scoped, tag = 'scoped memory for tpu_custom_call.1']
  %s0 = inlined_call_operand.<no memory space> [shape: f32[1], index: 0, kind: input, shape index: {}]
  %s1 = inlined_call_operand.hbm [shape: f32[32,128], index: 1, kind: input, shape index: {}]
  %s2 = inlined_call_operand.hbm [shape: f32[32,128], index: 2, kind: input, shape index: {}]
  %s3 = inlined_call_operand.hbm [shape: f32[1,1,128], index: 3, kind: output, shape index: {0}]
  %s4 = inlined_call_operand.hbm [shape: f32[1,1,128], index: 4, kind: output, shape index: {1}]
  %5 = xla_tuple %s3, %s4
  %s6 = sld [smem:[#allocation0]]
  $region50: #{tpu_custom_call.1} parent=0
    _
  %s8 = ssub.s32 1, %s6
  %s9 = scalar_select 0, %s8, %s6
  %10 = sst [smem:[#allocation3]] %s0
  $region1: #{tpu_custom_call.1} parent=0
    #allocation4 [shape = 'u8[16384]{0}', space=vmem, size = 0x4000, scoped, tag = 'input window, operand 1, single buffered']
    #allocation5 [shape = 's32[1]{0}', space=sflag, size = 0x4, scoped, tag = 'scoped memory for tpu_custom_call.1']
    #allocation6 [shape = 's32[1]{0}', space=sflag, size = 0x4, scoped, tag = 'scoped memory for tpu_custom_call.1']
    #allocation7 [shape = 'u8[16384]{0}', space=vmem, size = 0x4000, scoped, tag = 'input window, operand 2, single buffered']
    #allocation8 [shape = 's32[1]{0}', space=sflag, size = 0x4, scoped, tag = 'scoped memory for tpu_custom_call.1']
    #allocation9 [shape = 'u8[512]{0}', space=vmem, size = 0x400, scoped, tag = 'output window, operand 0, single buffered']
    #allocation10 [shape = 'u8[512]{0}', space=vmem, size = 0x400, scoped, tag = 'output window, operand 1, single buffered']
    #allocation11 [shape = 's32[1]{0}', space=sflag, size = 0x4, scoped, tag = 'scoped memory for tpu_custom_call.1']
    %11 = vsyncpa [#allocation5], 0
    %12 = vsyncpa [#allocation8], 0
    %13 = vsyncpa [#allocation6], 0
    %14 = vsyncpa [#allocation11], 0
    // Predicated region
    $region2: #{tpu_custom_call.1} parent=1 // pred_check
      _
    $region3: #{tpu_custom_call.1} parent=1 // pred_check_branch
      %16 = sbr.rel (0) target = $region5
    $region4: #{tpu_custom_call.1} parent=1 // pred_region
      _
    $region5: #{tpu_custom_call.1} parent=1 // pred_fallthru
      _
    // Predicated region
    $region6: #{tpu_custom_call.1} parent=1 // pred_check
      _
    $region7: #{tpu_custom_call.1} parent=1 // pred_check_branch
      %18 = sbr.rel (0) target = $region9
    $region8: #{tpu_custom_call.1} parent=1 // pred_region
      %s19 = sadd.s32 0, 0
      %s20 = smul.u32 4, %s19
      %s22 = ssub.s32 512, 512
      %23 = vsyncadd [#allocation5], %s22
      %s24 = smul.addr %s20, 128
      %s25 = scalar_lea.hbm %s1, %s24
      %s26 = sshll.u32 [#allocation4], 4
      %s27 = int_to_ptr.vmem [resolvable:$true] %s26
      %32 = dma.hbm_to_vmem [thread:$0]  %s25, 512, %s27, [#allocation5], 128, 128, 8
    $region9: #{tpu_custom_call.1} parent=1 // pred_fallthru
      _
    // Predicated region
    $region10: #{tpu_custom_call.1} parent=1 // pred_check
      _
    $region11: #{tpu_custom_call.1} parent=1 // pred_check_branch
      %34 = sbr.rel (0) target = $region13
    $region12: #{tpu_custom_call.1} parent=1 // pred_region
      %s35 = sadd.s32 0, 0
      %s36 = smul.u32 4, %s35
      %s38 = ssub.s32 512, 512
      %39 = vsyncadd [#allocation8], %s38
      %s40 = smul.addr %s36, 128
      %s41 = scalar_lea.hbm %s2, %s40
      %s42 = sshll.u32 [#allocation7], 4
      %s43 = int_to_ptr.vmem [resolvable:$true] %s42
      %48 = dma.hbm_to_vmem [thread:$0]  %s41, 512, %s43, [#allocation8], 128, 128, 8
    $region13: #{tpu_custom_call.1} parent=1 // pred_fallthru
      _
    // Predicated region
    $region14: #{tpu_custom_call.1} parent=1 // pred_check
      _
    $region15: #{tpu_custom_call.1} parent=1 // pred_check_branch
      %50 = sbr.rel (0) target = $region17
    $region16: #{tpu_custom_call.1} parent=1 // pred_region
      %51 = dma.done [#allocation5], 512
    $region17: #{tpu_custom_call.1} parent=1 // pred_fallthru
      _
    // Predicated region
    $region18: #{tpu_custom_call.1} parent=1 // pred_check
      _
    $region19: #{tpu_custom_call.1} parent=1 // pred_check_branch
      %53 = sbr.rel (0) target = $region21
    $region20: #{tpu_custom_call.1} parent=1 // pred_region
      %54 = dma.done [#allocation8], 512
    $region21: #{tpu_custom_call.1} parent=1 // pred_fallthru
      _
    %s55 = sadd.s32 0, 0
    %s56 = smul.u32 4, %s55
    %s57 = sadd.s32 0, 0
    %s58 = smul.u32 4, %s57
    %p59 = scmp.eq.s32.totalorder 0, 0
    // Predicated region
    $region22: #{tpu_custom_call.1} parent=1 // pred_check
      %p60 = pneg %p59
    $region23: #{tpu_custom_call.1} parent=1 // pred_check_branch
      %62 = sbr.rel (%p60) target = $region25
    $region24: #{tpu_custom_call.1} parent=1 // pred_region
      %s63 = scalar_lea.smem [#allocation2], 0
      %64 = sst [smem:[%s63]] -inf
      %65 = vst [vmem:[#allocation10] sm:$0x1] 0.0
    $region25: #{tpu_custom_call.1} parent=1 // pred_fallthru
      _
    %s66 = sld [smem:[#allocation3]]
    %s67 = sadd.s32 0, 0
    %s68 = smul.u32 %s67, 32
    %v69 = vlaneseq
    %v70 = vshrl.u32 %v69, 7
    %v71 = vadd.s32 %v70, 8
    %v72 = vadd.s32 %v70, 16
    %v73 = vadd.s32 %v70, 24
    %s74 = ssub.s32 32, %s68
    %v75 = vstv %s74
    %vm76 = vcmp.lt.s32.totalorder %v70, %v75
    %vm77 = vcmp.lt.s32.totalorder %v71, %v75
    %vm78 = vcmp.lt.s32.totalorder %v72, %v75
    %vm79 = vcmp.lt.s32.totalorder %v73, %v75
    %v80 = vld [vmem:[#allocation4] sm:$0xff]
    %v81 = vld [vmem:[#allocation4 + $0x8] sm:$0xff]
    %v82 = vld [vmem:[#allocation4 + $0x10] sm:$0xff]
    %v83 = vld [vmem:[#allocation4 + $0x18] sm:$0xff]
    %v84 = vld [vmem:[#allocation7] sm:$0xff]
    %v85 = vld [vmem:[#allocation7 + $0x8] sm:$0xff]
    %v86 = vld [vmem:[#allocation7 + $0x10] sm:$0xff]
    %v87 = vld [vmem:[#allocation7 + $0x18] sm:$0xff]
    %v88 = vsub.f32 %v80, %v84
    %v89 = vsub.f32 %v81, %v85
    %v90 = vsub.f32 %v82, %v86
    %v91 = vsub.f32 %v83, %v87
    %v92 = vstv %s66
    %v93 = vmul.f32 %v80, %v92
    %v94 = vmul.f32 %v81, %v92
    %v95 = vmul.f32 %v82, %v92
    %v96 = vmul.f32 %v83, %v92
    %v97 = vsel %vm76, %v93, -inf
    %v98 = vsel %vm77, %v94, -inf
    %v99 = vsel %vm78, %v95, -inf
    %v100 = vsel %vm79, %v96, -inf
    %s101 = sld [smem:[#allocation2]]
    %v102 = vmax.f32 %v97, %v98
    %v103 = vmax.f32 %v99, %v100
    %v104 = vmax.f32 %v102, %v103
    %105 = vmax.xlane.f32.xlu0 %v104
    %v106 = vpop.xlane.xlu0 %105
    %v107 = vrot.slane %v106, 4
    %v108 = vmax.f32 %v106, %v107
    %v109 = vrot.slane %v108, 2
    %v110 = vmax.f32 %v108, %v109
    %v111 = vrot.slane %v110, 1
    %v112 = vmax.f32 %v110, %v111
    %s113 = vtos %v112
    %s114 = smax.f32 %s101, %s113
    %s115 = scalar_lea.smem [#allocation2], 0
    %116 = sst [smem:[%s115]] %s114
    %p117 = scmp.gt.f32.partialorder %s114, %s101
    // Predicated region
    $region26: #{tpu_custom_call.1} parent=1 // pred_check
      %p118 = pneg %p117
    $region27: #{tpu_custom_call.1} parent=1 // pred_check_branch
      %120 = sbr.rel (%p118) target = $region29
    $region28: #{tpu_custom_call.1} parent=1 // pred_region
      %s121 = ssub.f32 %s101, %s114
      %v122 = vstv %s121
      %v123 = vmul.f32 %v122, 1.442695
      %v124 = vpow.pop %v123
      %v125 = vld [vmem:[#allocation10] sm:$0x1]
      %v126 = vmul.f32 %v125, %v124
      %127 = vst [vmem:[#allocation10] sm:$0x1] %v126
    $region29: #{tpu_custom_call.1} parent=1 // pred_fallthru
      _
    %v128 = vstv %s114
    %v129 = vsub.f32 %v97, %v128
    %v130 = vsub.f32 %v98, %v128
    %v131 = vsub.f32 %v99, %v128
    %v132 = vsub.f32 %v100, %v128
    %v133 = vmul.f32 %v129, 1.442695
    %v134 = vpow.pop %v133
    %v135 = vmul.f32 %v130, 1.442695
    %v136 = vpow.pop %v135
    %v137 = vmul.f32 %v131, 1.442695
    %v138 = vpow.pop %v137
    %v139 = vmul.f32 %v132, 1.442695
    %v140 = vpow.pop %v139
    %v141 = vmul.f32 %v88, %v88
    %v142 = vmul.f32 %v89, %v89
    %v143 = vmul.f32 %v90, %v90
    %v144 = vmul.f32 %v91, %v91
    %v145 = vmul.f32 %v134, %v141
    %v146 = vmul.f32 %v136, %v142
    %v147 = vmul.f32 %v138, %v143
    %v148 = vmul.f32 %v140, %v144
    %v149 = vsel %vm76, %v145, 0.0
    %v150 = vsel %vm77, %v146, 0.0
    %v151 = vsel %vm78, %v147, 0.0
    %v152 = vsel %vm79, %v148, 0.0
    %v153 = vadd.f32 %v149, %v150
    %v154 = vadd.f32 %v153, %v151
    %v155 = vadd.f32 %v154, %v152
    %v156 = vrot.slane %v155, 4
    %v157 = vadd.f32 %v155, %v156
    %v158 = vrot.slane %v157, 2
    %v159 = vadd.f32 %v157, %v158
    %v160 = vrot.slane %v159, 1
    %v161 = vadd.f32 %v159, %v160
    %v162 = vld [vmem:[#allocation10] sm:$0x1]
    %v163 = vadd.f32 %v162, %v161
    %164 = vst [vmem:[#allocation10] sm:$0x1] %v163
    // Predicated region
    $region30: #{tpu_custom_call.1} parent=1 // pred_check
      %p165 = pneg %p59
    $region31: #{tpu_custom_call.1} parent=1 // pred_check_branch
      %167 = sbr.rel (%p165) target = $region33
    $region32: #{tpu_custom_call.1} parent=1 // pred_region
      %s168 = sld [smem:[#allocation2]]
      %v169 = vstv %s168
      %170 = vst [vmem:[#allocation9] sm:$0x1] %v169
    $region33: #{tpu_custom_call.1} parent=1 // pred_fallthru
      _
    // Predicated region
    $region34: #{tpu_custom_call.1} parent=1 // pred_check
      _
    $region35: #{tpu_custom_call.1} parent=1 // pred_check_branch
      %172 = sbr.rel (0) target = $region37
    $region36: #{tpu_custom_call.1} parent=1 // pred_region
      %s174 = ssub.s32 16, 16
      %175 = vsyncadd [#allocation6], %s174
      %s177 = sshll.u32 [#allocation9], 4
      %s178 = int_to_ptr.vmem [resolvable:$true] %s177
      %180 = dma.vmem_to_hbm [thread:$0]  %s178, 16, %s3, [#allocation6]
    $region37: #{tpu_custom_call.1} parent=1 // pred_fallthru
      _
    // Predicated region
    $region38: #{tpu_custom_call.1} parent=1 // pred_check
      _
    $region39: #{tpu_custom_call.1} parent=1 // pred_check_branch
      %182 = sbr.rel (0) target = $region41
    $region40: #{tpu_custom_call.1} parent=1 // pred_region
      %s184 = ssub.s32 16, 16
      %185 = vsyncadd [#allocation11], %s184
      %s187 = sshll.u32 [#allocation10], 4
      %s188 = int_to_ptr.vmem [resolvable:$true] %s187
      %190 = dma.vmem_to_hbm [thread:$0]  %s188, 16, %s4, [#allocation11]
    $region41: #{tpu_custom_call.1} parent=1 // pred_fallthru
      _
    // Predicated region
    $region42: #{tpu_custom_call.1} parent=1 // pred_check
      _
    $region43: #{tpu_custom_call.1} parent=1 // pred_check_branch
      %192 = sbr.rel (0) target = $region45
    $region44: #{tpu_custom_call.1} parent=1 // pred_region
      %193 = dma.done [#allocation6], 16
    $region45: #{tpu_custom_call.1} parent=1 // pred_fallthru
      _
    // Predicated region
    $region46: #{tpu_custom_call.1} parent=1 // pred_check
      _
    $region47: #{tpu_custom_call.1} parent=1 // pred_check_branch
      %195 = sbr.rel (0) target = $region49
    $region48: #{tpu_custom_call.1} parent=1 // pred_region
      %196 = dma.done [#allocation11], 16
    $region49: #{tpu_custom_call.1} parent=1 // pred_fallthru
      _
    %197 = vsyncpa [#allocation5], 1
    %198 = vsyncpa [#allocation8], 1
    %199 = vsyncpa [#allocation6], 1
    %200 = vsyncpa [#allocation11], 1

</llo_original>
